<compile_context>
chip_gen: v5e
topology: v5e:2x2
jax: 0.10.0
libtpu: 0.0.40
codegen_flags: <defaults>
</compile_context>

<pallas_src>
import jax
import jax.numpy as jnp
from jax.experimental import pallas as pl
from jax.experimental.pallas import tpu as pltpu

IN_FEATURES = 32 * 32 * 3   # 3072
OUT_FEATURES = 10
N_PAD = 128                 # lane-dense padded output width


def _round_up(x, m):
    return ((x + m - 1) // m) * m


def _choose_tile_b(batch, cap=256):
    """Batch tile: multiple of 8 sublanes, >= 4 grid steps when possible, <= cap."""
    t = _round_up(max(1, -(-batch // 4)), 8)   # ~B/4 rounded up to 8
    return max(8, min(cap, t))


def linear_kernel(x_ref, w_ref, b_ref, o_ref):
    # x_ref: [TB, K], w_ref: [K, N_PAD], b_ref: [1, N_PAD], o_ref: [TB, N_PAD]
    acc = jnp.dot(x_ref[...], w_ref[...], preferred_element_type=jnp.float32)
    o_ref[...] = (acc + b_ref[...]).astype(o_ref.dtype)


def prepare_params(w, b):
    """One-time padding/transpose of PyTorch-layout params (outside forward).

    w: [10, 3072] (nn.Linear layout), b: [10]
    Returns w_p: [3072, 128] (MXU-native RHS, zero-padded cols), b_p: [1, 128].
    """
    w_p = jnp.pad(w, ((0, N_PAD - OUT_FEATURES), (0, 0))).T           # [3072, 128]
    b_p = jnp.pad(b, (0, N_PAD - OUT_FEATURES)).reshape(1, N_PAD)     # [1, 128]
    return w_p, b_p


@jax.jit
def test_network_forward(x_nchw, w_p, b_p):
    """x_nchw: [B, 3, 32, 32] f32; w_p: [3072, 128]; b_p: [1, 128]."""
    B = x_nchw.shape[0]
    # torch.flatten(x, 1): row-major flatten over (C, H, W)
    x_flat = x_nchw.reshape(B, -1)                                    # [B, 3072]

    tile_b = _choose_tile_b(B)
    grid = (pl.cdiv(B, tile_b),)   # ragged last block: Pallas masks its stores

    out = pl.pallas_call(
        linear_kernel,
        out_shape=jax.ShapeDtypeStruct((B, N_PAD), jnp.float32),
        grid_spec=pl.GridSpec(
            grid=grid,
            in_specs=[
                # x: stream batch tiles (double-buffered by default)
                pl.BlockSpec((tile_b, IN_FEATURES), lambda i: (i, 0)),
                # w, b: constant block index -> resident across grid steps
                pl.BlockSpec((IN_FEATURES, N_PAD), lambda i: (0, 0)),
                pl.BlockSpec((1, N_PAD), lambda i: (0, 0)),
            ],
            out_specs=pl.BlockSpec((tile_b, N_PAD), lambda i: (i, 0)),
        ),
        compiler_params=pltpu.CompilerParams(
            dimension_semantics=("parallel",),   # shard batch tiles across TCs
        ),
        cost_estimate=pl.CostEstimate(
            flops=2 * B * IN_FEATURES * OUT_FEATURES,       # useful FLOPs only
            transcendentals=0,
            bytes_accessed=(B * IN_FEATURES * 4             # x (unpadded)
                            + IN_FEATURES * N_PAD * 4       # w (counted once)
                            + B * OUT_FEATURES * 4),        # useful output
        ),
    )(x_flat, w_p, b_p)

    return out[:, :OUT_FEATURES]


def init_params(key):
    # Deterministic init mimicking nn.Linear defaults: U(-1/sqrt(K), 1/sqrt(K))
    kw, kb = jax.random.split(key)
    bound = 1.0 / jnp.sqrt(jnp.float32(IN_FEATURES))
    w = jax.random.uniform(kw, (OUT_FEATURES, IN_FEATURES), jnp.float32,
                           minval=-bound, maxval=bound)
    b = jax.random.uniform(kb, (OUT_FEATURES,), jnp.float32,
                           minval=-bound, maxval=bound)
    return w, b


if __name__ == "__main__":
    key = jax.random.PRNGKey(0)
    kx, kp = jax.random.split(key)

    # CIFAR-shaped input (the Linear layer requires 32*32*3 features), small batch.
    B = 2
    x = jax.random.normal(kx, (B, 3, 32, 32), jnp.float32)

    w, b = init_params(kp)
    w_p, b_p = prepare_params(w, b)   # one-time pad + transpose, not per-call

    out = test_network_forward(x, w_p, b_p)
    out = jax.block_until_ready(out)

    # Reference check in plain JAX against the original (PyTorch-layout) params
    ref = x.reshape(B, -1) @ w.T + b
    assert out.shape == (B, OUT_FEATURES)
    assert jnp.allclose(out, ref, atol=1e-4, rtol=1e-4)

    print("KERNEL_OK")
</pallas_src>

<mosaic_0001>
module attributes {stable_mosaic.version = 11 : i64} {
  func.func @linear_kernel(%arg0: i32, %arg1: memref<8x3072xf32, #tpu.memory_space<vmem>>, %arg2: memref<3072x128xf32, #tpu.memory_space<vmem>>, %arg3: memref<1x128xf32, #tpu.memory_space<vmem>>, %arg4: memref<8x128xf32, #tpu.memory_space<vmem>>) attributes {dimension_semantics = [#tpu.dimension_semantics<parallel>], iteration_bounds = array<i64: 1>, scalar_prefetch = 0 : i64, scratch_operands = 0 : i64, tpu.core_type = #tpu.core_type<tc>, window_params = [{transform_indices = @transform_0, window_bounds = array<i64: 8, 3072>}, {pipeline_mode = #tpu.pipeline_mode<synchronous>, transform_indices = @transform_1, window_bounds = array<i64: 3072, 128>}, {pipeline_mode = #tpu.pipeline_mode<synchronous>, transform_indices = @transform_2, window_bounds = array<i64: 1, 128>}, {transform_indices = @transform_3, window_bounds = array<i64: 8, 128>}]} {
    %c0 = arith.constant 0 : index
    %c0_0 = arith.constant 0 : index
    %0 = vector.load %arg1[%c0, %c0_0] : memref<8x3072xf32, #tpu.memory_space<vmem>>, vector<8x3072xf32>
    %c0_1 = arith.constant 0 : index
    %c0_2 = arith.constant 0 : index
    %1 = vector.load %arg2[%c0_1, %c0_2] : memref<3072x128xf32, #tpu.memory_space<vmem>>, vector<3072x128xf32>
    %cst = arith.constant dense<0.000000e+00> : vector<8x128xf32>
    %2 = tpu.matmul %0, %1, %cst {dimension_numbers = #tpu.dot_dimension_numbers<[1], [0], [0], [1], [0, 0, 1, 1], [], []>} : vector<8x3072xf32>, vector<3072x128xf32>, vector<8x128xf32> -> vector<8x128xf32>
    %c0_3 = arith.constant 0 : index
    %c0_4 = arith.constant 0 : index
    %3 = vector.load %arg3[%c0_3, %c0_4] : memref<1x128xf32, #tpu.memory_space<vmem>>, vector<1x128xf32>
    %4 = vector.broadcast %3 : vector<1x128xf32> to vector<8x128xf32>
    %5 = arith.addf %2, %4 : vector<8x128xf32>
    %c0_5 = arith.constant 0 : index
    %c0_6 = arith.constant 0 : index
    %6 = vector.load %arg4[%c0_5, %c0_6] : memref<8x128xf32, #tpu.memory_space<vmem>>, vector<8x128xf32>
    tpu.vector_store %arg4[%c0_5, %c0_6], %5 {strides = array<i32>} : memref<8x128xf32, #tpu.memory_space<vmem>>, vector<8x128xf32>,
    return
  }
  func.func @transform_0(%arg0: i32) -> (i32, i32) {
    %c0_i32 = arith.constant 0 : i32
    %c0_i32_0 = arith.constant 0 : i32
    return %arg0, %c0_i32 : i32, i32
  }
  func.func @transform_1(%arg0: i32) -> (i32, i32) {
    %c0_i32 = arith.constant 0 : i32
    %c0_i32_0 = arith.constant 0 : i32
    %c0_i32_1 = arith.constant 0 : i32
    return %c0_i32, %c0_i32_0 : i32, i32
  }
  func.func @transform_2(%arg0: i32) -> (i32, i32) {
    %c0_i32 = arith.constant 0 : i32
    %c0_i32_0 = arith.constant 0 : i32
    %c0_i32_1 = arith.constant 0 : i32
    return %c0_i32, %c0_i32_0 : i32, i32
  }
  func.func @transform_3(%arg0: i32) -> (i32, i32) {
    %c0_i32 = arith.constant 0 : i32
    %c0_i32_0 = arith.constant 0 : i32
    return %arg0, %c0_i32 : i32, i32
  }
}

</mosaic_0001>

<llo_original>
// kernel: test_network_forward.1
$region0: #{test_network_forward.1}
  #allocation0 [shape = 'u32[]', space=smem, size = 0x4, offset = 0x4, fixed_abs, tag = 'smem constant byte address 0x4 - core index']
  #allocation1 [shape = 'u32[72,128]{1,0:T(1,128)}', space=vmem, size = 0x9000, scoped, tag = 'internal scratch']
  %s0 = inlined_call_operand.vmem [shape: f32[2,3072], index: 0, kind: input, shape index: {}]
  %s1 = inlined_call_operand.hbm [shape: f32[3072,128], index: 1, kind: input, shape index: {}]
  %s2 = inlined_call_operand.hbm [shape: f32[1,128], index: 2, kind: input, shape index: {}]
  %s3 = inlined_call_operand.hbm [shape: f32[2,128], index: 3, kind: output, shape index: {}]
  %s4 = sld [smem:[#allocation0]]
  $region30: #{test_network_forward.1} parent=0
    _
  %s6 = ssub.s32 1, %s4
  %s7 = scalar_select 0, %s6, %s4
  $region1: #{test_network_forward.1} parent=0
    #allocation2 [shape = 'u8[1572864]{0}', space=vmem, size = 0x180000, scoped, tag = 'input window, operand 1, single buffered']
    #allocation3 [shape = 's32[1]{0}', space=sflag, size = 0x4, scoped, tag = 'scoped memory for test_network_forward.1']
    #allocation4 [shape = 's32[1]{0}', space=sflag, size = 0x4, scoped, tag = 'scoped memory for test_network_forward.1']
    #allocation5 [shape = 'u8[512]{0}', space=vmem, size = 0x400, scoped, tag = 'input window, operand 2, single buffered']
    #allocation6 [shape = 's32[1]{0}', space=sflag, size = 0x4, scoped, tag = 'scoped memory for test_network_forward.1']
    #allocation7 [shape = 'u8[4096]{0}', space=vmem, size = 0x1000, scoped, tag = 'output window, operand 0, single buffered']
    %8 = vsyncpa [#allocation3], 0
    %9 = vsyncpa [#allocation6], 0
    %10 = vsyncpa [#allocation4], 0
    // Predicated region
    $region2: #{test_network_forward.1} parent=1 // pred_check
      _
    $region3: #{test_network_forward.1} parent=1 // pred_check_branch
      %12 = sbr.rel (0) target = $region5
    $region4: #{test_network_forward.1} parent=1 // pred_region
      _
    $region5: #{test_network_forward.1} parent=1 // pred_fallthru
      _
    // Predicated region
    $region6: #{test_network_forward.1} parent=1 // pred_check
      _
    $region7: #{test_network_forward.1} parent=1 // pred_check_branch
      %14 = sbr.rel (0) target = $region9
    $region8: #{test_network_forward.1} parent=1 // pred_region
      %16 = vsyncadd [#allocation3], 0
      %s17 = sshll.u32 %s1, 4
      %s18 = int_to_ptr.hbm [resolvable:$true] %s17
      %s19 = sshll.u32 [#allocation2], 4
      %s20 = int_to_ptr.vmem [resolvable:$true] %s19
      %25 = dma.hbm_to_vmem [thread:$0]  %s18, 49152, %s20, [#allocation3], 128, 128, 8
    $region9: #{test_network_forward.1} parent=1 // pred_fallthru
      _
    // Predicated region
    $region10: #{test_network_forward.1} parent=1 // pred_check
      _
    $region11: #{test_network_forward.1} parent=1 // pred_check_branch
      %27 = sbr.rel (0) target = $region13
    $region12: #{test_network_forward.1} parent=1 // pred_region
      %29 = vsyncadd [#allocation6], 0
      %s31 = sshll.u32 %s2, 4
      %s32 = int_to_ptr.hbm [resolvable:$true] %s31
      %s33 = sshll.u32 [#allocation5], 4
      %s34 = int_to_ptr.vmem [resolvable:$true] %s33
      %36 = dma.hbm_to_vmem [thread:$0]  %s32, 16, %s34, [#allocation6]
    $region13: #{test_network_forward.1} parent=1 // pred_fallthru
      _
    // Predicated region
    $region14: #{test_network_forward.1} parent=1 // pred_check
      _
    $region15: #{test_network_forward.1} parent=1 // pred_check_branch
      %38 = sbr.rel (0) target = $region17
    $region16: #{test_network_forward.1} parent=1 // pred_region
      %40 = dma.done [#allocation3], 49152
    $region17: #{test_network_forward.1} parent=1 // pred_fallthru
      _
    // Predicated region
    $region18: #{test_network_forward.1} parent=1 // pred_check
      _
    $region19: #{test_network_forward.1} parent=1 // pred_check_branch
      %42 = sbr.rel (0) target = $region21
    $region20: #{test_network_forward.1} parent=1 // pred_region
      %44 = dma.done [#allocation6], 16
    $region21: #{test_network_forward.1} parent=1 // pred_fallthru
      _
    %v45 = vld [vmem:[%s0] sm:$0xff]
    %v46 = vld [vmem:[%s0 + $0x8] sm:$0xff]
    %v47 = vld [vmem:[%s0 + $0x10] sm:$0xff]
    %v48 = vld [vmem:[%s0 + $0x18] sm:$0xff]
    %v49 = vld [vmem:[%s0 + $0x20] sm:$0xff]
    %v50 = vld [vmem:[%s0 + $0x28] sm:$0xff]
    %v51 = vld [vmem:[%s0 + $0x30] sm:$0xff]
    %v52 = vld [vmem:[%s0 + $0x38] sm:$0xff]
    %v53 = vld [vmem:[%s0 + $0x40] sm:$0xff]
    %v54 = vld [vmem:[%s0 + $0x48] sm:$0xff]
    %v55 = vld [vmem:[%s0 + $0x50] sm:$0xff]
    %v56 = vld [vmem:[%s0 + $0x58] sm:$0xff]
    %v57 = vld [vmem:[%s0 + $0x60] sm:$0xff]
    %v58 = vld [vmem:[%s0 + $0x68] sm:$0xff]
    %v59 = vld [vmem:[%s0 + $0x70] sm:$0xff]
    %v60 = vld [vmem:[%s0 + $0x78] sm:$0xff]
    %v61 = vld [vmem:[%s0 + $0x80] sm:$0xff]
    %v62 = vld [vmem:[%s0 + $0x88] sm:$0xff]
    %v63 = vld [vmem:[%s0 + $0x90] sm:$0xff]
    %v64 = vld [vmem:[%s0 + $0x98] sm:$0xff]
    %v65 = vld [vmem:[%s0 + $0xa0] sm:$0xff]
    %v66 = vld [vmem:[%s0 + $0xa8] sm:$0xff]
    %v67 = vld [vmem:[%s0 + $0xb0] sm:$0xff]
    %v68 = vld [vmem:[%s0 + $0xb8] sm:$0xff]
    %v69 = vld [vmem:[#allocation2] sm:$0xff]
    %v70 = vld [vmem:[#allocation2 + $0x8] sm:$0xff]
    %v71 = vld [vmem:[#allocation2 + $0x10] sm:$0xff]
    %v72 = vld [vmem:[#allocation2 + $0x18] sm:$0xff]
    %v73 = vld [vmem:[#allocation2 + $0x20] sm:$0xff]
    %v74 = vld [vmem:[#allocation2 + $0x28] sm:$0xff]
    %v75 = vld [vmem:[#allocation2 + $0x30] sm:$0xff]
    %v76 = vld [vmem:[#allocation2 + $0x38] sm:$0xff]
    %v77 = vld [vmem:[#allocation2 + $0x40] sm:$0xff]
    %v78 = vld [vmem:[#allocation2 + $0x48] sm:$0xff]
    %v79 = vld [vmem:[#allocation2 + $0x50] sm:$0xff]
    %v80 = vld [vmem:[#allocation2 + $0x58] sm:$0xff]
    %v81 = vld [vmem:[#allocation2 + $0x60] sm:$0xff]
    %v82 = vld [vmem:[#allocation2 + $0x68] sm:$0xff]
    %v83 = vld [vmem:[#allocation2 + $0x70] sm:$0xff]
    %v84 = vld [vmem:[#allocation2 + $0x78] sm:$0xff]
    %v85 = vld [vmem:[#allocation2 + $0x80] sm:$0xff]
    %v86 = vld [vmem:[#allocation2 + $0x88] sm:$0xff]
    %v87 = vld [vmem:[#allocation2 + $0x90] sm:$0xff]
    %v88 = vld [vmem:[#allocation2 + $0x98] sm:$0xff]
    %v89 = vld [vmem:[#allocation2 + $0xa0] sm:$0xff]
    %v90 = vld [vmem:[#allocation2 + $0xa8] sm:$0xff]
    %v91 = vld [vmem:[#allocation2 + $0xb0] sm:$0xff]
    %v92 = vld [vmem:[#allocation2 + $0xb8] sm:$0xff]
    %v93 = vld [vmem:[#allocation2 + $0xc0] sm:$0xff]
    %v94 = vld [vmem:[#allocation2 + $0xc8] sm:$0xff]
    %v95 = vld [vmem:[#allocation2 + $0xd0] sm:$0xff]
    %v96 = vld [vmem:[#allocation2 + $0xd8] sm:$0xff]
    %v97 = vld [vmem:[#allocation2 + $0xe0] sm:$0xff]
    %v98 = vld [vmem:[#allocation2 + $0xe8] sm:$0xff]
    %v99 = vld [vmem:[#allocation2 + $0xf0] sm:$0xff]
    %v100 = vld [vmem:[#allocation2 + $0xf8] sm:$0xff]
    %v101 = vld [vmem:[#allocation2 + $0x100] sm:$0xff]
    %v102 = vld [vmem:[#allocation2 + $0x108] sm:$0xff]
    %v103 = vld [vmem:[#allocation2 + $0x110] sm:$0xff]
    %v104 = vld [vmem:[#allocation2 + $0x118] sm:$0xff]
    %v105 = vld [vmem:[#allocation2 + $0x120] sm:$0xff]
    %v106 = vld [vmem:[#allocation2 + $0x128] sm:$0xff]
    %v107 = vld [vmem:[#allocation2 + $0x130] sm:$0xff]
    %v108 = vld [vmem:[#allocation2 + $0x138] sm:$0xff]
    %v109 = vld [vmem:[#allocation2 + $0x140] sm:$0xff]
    %v110 = vld [vmem:[#allocation2 + $0x148] sm:$0xff]
    %v111 = vld [vmem:[#allocation2 + $0x150] sm:$0xff]
    %v112 = vld [vmem:[#allocation2 + $0x158] sm:$0xff]
    %v113 = vld [vmem:[#allocation2 + $0x160] sm:$0xff]
    %v114 = vld [vmem:[#allocation2 + $0x168] sm:$0xff]
    %v115 = vld [vmem:[#allocation2 + $0x170] sm:$0xff]
    %v116 = vld [vmem:[#allocation2 + $0x178] sm:$0xff]
    %v117 = vld [vmem:[#allocation2 + $0x180] sm:$0xff]
    %v118 = vld [vmem:[#allocation2 + $0x188] sm:$0xff]
    %v119 = vld [vmem:[#allocation2 + $0x190] sm:$0xff]
    %v120 = vld [vmem:[#allocation2 + $0x198] sm:$0xff]
    %v121 = vld [vmem:[#allocation2 + $0x1a0] sm:$0xff]
    %v122 = vld [vmem:[#allocation2 + $0x1a8] sm:$0xff]
    %v123 = vld [vmem:[#allocation2 + $0x1b0] sm:$0xff]
    %v124 = vld [vmem:[#allocation2 + $0x1b8] sm:$0xff]
    %v125 = vld [vmem:[#allocation2 + $0x1c0] sm:$0xff]
    %v126 = vld [vmem:[#allocation2 + $0x1c8] sm:$0xff]
    %v127 = vld [vmem:[#allocation2 + $0x1d0] sm:$0xff]
    %v128 = vld [vmem:[#allocation2 + $0x1d8] sm:$0xff]
    %v129 = vld [vmem:[#allocation2 + $0x1e0] sm:$0xff]
    %v130 = vld [vmem:[#allocation2 + $0x1e8] sm:$0xff]
    %v131 = vld [vmem:[#allocation2 + $0x1f0] sm:$0xff]
    %v132 = vld [vmem:[#allocation2 + $0x1f8] sm:$0xff]
    %v133 = vld [vmem:[#allocation2 + $0x200] sm:$0xff]
    %v134 = vld [vmem:[#allocation2 + $0x208] sm:$0xff]
    %v135 = vld [vmem:[#allocation2 + $0x210] sm:$0xff]
    %v136 = vld [vmem:[#allocation2 + $0x218] sm:$0xff]
    %v137 = vld [vmem:[#allocation2 + $0x220] sm:$0xff]
    %v138 = vld [vmem:[#allocation2 + $0x228] sm:$0xff]
    %v139 = vld [vmem:[#allocation2 + $0x230] sm:$0xff]
    %v140 = vld [vmem:[#allocation2 + $0x238] sm:$0xff]
    %v141 = vld [vmem:[#allocation2 + $0x240] sm:$0xff]
    %v142 = vld [vmem:[#allocation2 + $0x248] sm:$0xff]
    %v143 = vld [vmem:[#allocation2 + $0x250] sm:$0xff]
    %v144 = vld [vmem:[#allocation2 + $0x258] sm:$0xff]
    %v145 = vld [vmem:[#allocation2 + $0x260] sm:$0xff]
    %v146 = vld [vmem:[#allocation2 + $0x268] sm:$0xff]
    %v147 = vld [vmem:[#allocation2 + $0x270] sm:$0xff]
    %v148 = vld [vmem:[#allocation2 + $0x278] sm:$0xff]
    %v149 = vld [vmem:[#allocation2 + $0x280] sm:$0xff]
    %v150 = vld [vmem:[#allocation2 + $0x288] sm:$0xff]
    %v151 = vld [vmem:[#allocation2 + $0x290] sm:$0xff]
    %v152 = vld [vmem:[#allocation2 + $0x298] sm:$0xff]
    %v153 = vld [vmem:[#allocation2 + $0x2a0] sm:$0xff]
    %v154 = vld [vmem:[#allocation2 + $0x2a8] sm:$0xff]
    %v155 = vld [vmem:[#allocation2 + $0x2b0] sm:$0xff]
    %v156 = vld [vmem:[#allocation2 + $0x2b8] sm:$0xff]
    %v157 = vld [vmem:[#allocation2 + $0x2c0] sm:$0xff]
    %v158 = vld [vmem:[#allocation2 + $0x2c8] sm:$0xff]
    %v159 = vld [vmem:[#allocation2 + $0x2d0] sm:$0xff]
    %v160 = vld [vmem:[#allocation2 + $0x2d8] sm:$0xff]
    %v161 = vld [vmem:[#allocation2 + $0x2e0] sm:$0xff]
    %v162 = vld [vmem:[#allocation2 + $0x2e8] sm:$0xff]
    %v163 = vld [vmem:[#allocation2 + $0x2f0] sm:$0xff]
    %v164 = vld [vmem:[#allocation2 + $0x2f8] sm:$0xff]
    %v165 = vld [vmem:[#allocation2 + $0x300] sm:$0xff]
    %v166 = vld [vmem:[#allocation2 + $0x308] sm:$0xff]
    %v167 = vld [vmem:[#allocation2 + $0x310] sm:$0xff]
    %v168 = vld [vmem:[#allocation2 + $0x318] sm:$0xff]
    %v169 = vld [vmem:[#allocation2 + $0x320] sm:$0xff]
    %v170 = vld [vmem:[#allocation2 + $0x328] sm:$0xff]
    %v171 = vld [vmem:[#allocation2 + $0x330] sm:$0xff]
    %v172 = vld [vmem:[#allocation2 + $0x338] sm:$0xff]
    %v173 = vld [vmem:[#allocation2 + $0x340] sm:$0xff]
    %v174 = vld [vmem:[#allocation2 + $0x348] sm:$0xff]
    %v175 = vld [vmem:[#allocation2 + $0x350] sm:$0xff]
    %v176 = vld [vmem:[#allocation2 + $0x358] sm:$0xff]
    %v177 = vld [vmem:[#allocation2 + $0x360] sm:$0xff]
    %v178 = vld [vmem:[#allocation2 + $0x368] sm:$0xff]
    %v179 = vld [vmem:[#allocation2 + $0x370] sm:$0xff]
    %v180 = vld [vmem:[#allocation2 + $0x378] sm:$0xff]
    %v181 = vld [vmem:[#allocation2 + $0x380] sm:$0xff]
    %v182 = vld [vmem:[#allocation2 + $0x388] sm:$0xff]
    %v183 = vld [vmem:[#allocation2 + $0x390] sm:$0xff]
    %v184 = vld [vmem:[#allocation2 + $0x398] sm:$0xff]
    %v185 = vld [vmem:[#allocation2 + $0x3a0] sm:$0xff]
    %v186 = vld [vmem:[#allocation2 + $0x3a8] sm:$0xff]
    %v187 = vld [vmem:[#allocation2 + $0x3b0] sm:$0xff]
    %v188 = vld [vmem:[#allocation2 + $0x3b8] sm:$0xff]
    %v189 = vld [vmem:[#allocation2 + $0x3c0] sm:$0xff]
    %v190 = vld [vmem:[#allocation2 + $0x3c8] sm:$0xff]
    %v191 = vld [vmem:[#allocation2 + $0x3d0] sm:$0xff]
    %v192 = vld [vmem:[#allocation2 + $0x3d8] sm:$0xff]
    %v193 = vld [vmem:[#allocation2 + $0x3e0] sm:$0xff]
    %v194 = vld [vmem:[#allocation2 + $0x3e8] sm:$0xff]
    %v195 = vld [vmem:[#allocation2 + $0x3f0] sm:$0xff]
    %v196 = vld [vmem:[#allocation2 + $0x3f8] sm:$0xff]
    %v197 = vld [vmem:[#allocation2 + $0x400] sm:$0xff]
    %v198 = vld [vmem:[#allocation2 + $0x408] sm:$0xff]
    %v199 = vld [vmem:[#allocation2 + $0x410] sm:$0xff]
    %v200 = vld [vmem:[#allocation2 + $0x418] sm:$0xff]
    %v201 = vld [vmem:[#allocation2 + $0x420] sm:$0xff]
    %v202 = vld [vmem:[#allocation2 + $0x428] sm:$0xff]
    %v203 = vld [vmem:[#allocation2 + $0x430] sm:$0xff]
    %v204 = vld [vmem:[#allocation2 + $0x438] sm:$0xff]
    %v205 = vld [vmem:[#allocation2 + $0x440] sm:$0xff]
    %v206 = vld [vmem:[#allocation2 + $0x448] sm:$0xff]
    %v207 = vld [vmem:[#allocation2 + $0x450] sm:$0xff]
    %v208 = vld [vmem:[#allocation2 + $0x458] sm:$0xff]
    %v209 = vld [vmem:[#allocation2 + $0x460] sm:$0xff]
    %v210 = vld [vmem:[#allocation2 + $0x468] sm:$0xff]
    %v211 = vld [vmem:[#allocation2 + $0x470] sm:$0xff]
    %v212 = vld [vmem:[#allocation2 + $0x478] sm:$0xff]
    %v213 = vld [vmem:[#allocation2 + $0x480] sm:$0xff]
    %v214 = vld [vmem:[#allocation2 + $0x488] sm:$0xff]
    %v215 = vld [vmem:[#allocation2 + $0x490] sm:$0xff]
    %v216 = vld [vmem:[#allocation2 + $0x498] sm:$0xff]
    %v217 = vld [vmem:[#allocation2 + $0x4a0] sm:$0xff]
    %v218 = vld [vmem:[#allocation2 + $0x4a8] sm:$0xff]
    %v219 = vld [vmem:[#allocation2 + $0x4b0] sm:$0xff]
    %v220 = vld [vmem:[#allocation2 + $0x4b8] sm:$0xff]
    %v221 = vld [vmem:[#allocation2 + $0x4c0] sm:$0xff]
    %v222 = vld [vmem:[#allocation2 + $0x4c8] sm:$0xff]
    %v223 = vld [vmem:[#allocation2 + $0x4d0] sm:$0xff]
    %v224 = vld [vmem:[#allocation2 + $0x4d8] sm:$0xff]
    %v225 = vld [vmem:[#allocation2 + $0x4e0] sm:$0xff]
    %v226 = vld [vmem:[#allocation2 + $0x4e8] sm:$0xff]
    %v227 = vld [vmem:[#allocation2 + $0x4f0] sm:$0xff]
    %v228 = vld [vmem:[#allocation2 + $0x4f8] sm:$0xff]
    %v229 = vld [vmem:[#allocation2 + $0x500] sm:$0xff]
    %v230 = vld [vmem:[#allocation2 + $0x508] sm:$0xff]
    %v231 = vld [vmem:[#allocation2 + $0x510] sm:$0xff]
    %v232 = vld [vmem:[#allocation2 + $0x518] sm:$0xff]
    %v233 = vld [vmem:[#allocation2 + $0x520] sm:$0xff]
    %v234 = vld [vmem:[#allocation2 + $0x528] sm:$0xff]
    %v235 = vld [vmem:[#allocation2 + $0x530] sm:$0xff]
    %v236 = vld [vmem:[#allocation2 + $0x538] sm:$0xff]
    %v237 = vld [vmem:[#allocation2 + $0x540] sm:$0xff]
    %v238 = vld [vmem:[#allocation2 + $0x548] sm:$0xff]
    %v239 = vld [vmem:[#allocation2 + $0x550] sm:$0xff]
    %v240 = vld [vmem:[#allocation2 + $0x558] sm:$0xff]
    %v241 = vld [vmem:[#allocation2 + $0x560] sm:$0xff]
    %v242 = vld [vmem:[#allocation2 + $0x568] sm:$0xff]
    %v243 = vld [vmem:[#allocation2 + $0x570] sm:$0xff]
    %v244 = vld [vmem:[#allocation2 + $0x578] sm:$0xff]
    %v245 = vld [vmem:[#allocation2 + $0x580] sm:$0xff]
    %v246 = vld [vmem:[#allocation2 + $0x588] sm:$0xff]
    %v247 = vld [vmem:[#allocation2 + $0x590] sm:$0xff]
    %v248 = vld [vmem:[#allocation2 + $0x598] sm:$0xff]
    %v249 = vld [vmem:[#allocation2 + $0x5a0] sm:$0xff]
    %v250 = vld [vmem:[#allocation2 + $0x5a8] sm:$0xff]
    %v251 = vld [vmem:[#allocation2 + $0x5b0] sm:$0xff]
    %v252 = vld [vmem:[#allocation2 + $0x5b8] sm:$0xff]
    %v253 = vld [vmem:[#allocation2 + $0x5c0] sm:$0xff]
    %v254 = vld [vmem:[#allocation2 + $0x5c8] sm:$0xff]
    %v255 = vld [vmem:[#allocation2 + $0x5d0] sm:$0xff]
    %v256 = vld [vmem:[#allocation2 + $0x5d8] sm:$0xff]
    %v257 = vld [vmem:[#allocation2 + $0x5e0] sm:$0xff]
    %v258 = vld [vmem:[#allocation2 + $0x5e8] sm:$0xff]
    %v259 = vld [vmem:[#allocation2 + $0x5f0] sm:$0xff]
    %v260 = vld [vmem:[#allocation2 + $0x5f8] sm:$0xff]
    %v261 = vld [vmem:[#allocation2 + $0x600] sm:$0xff]
    %v262 = vld [vmem:[#allocation2 + $0x608] sm:$0xff]
    %v263 = vld [vmem:[#allocation2 + $0x610] sm:$0xff]
    %v264 = vld [vmem:[#allocation2 + $0x618] sm:$0xff]
    %v265 = vld [vmem:[#allocation2 + $0x620] sm:$0xff]
    %v266 = vld [vmem:[#allocation2 + $0x628] sm:$0xff]
    %v267 = vld [vmem:[#allocation2 + $0x630] sm:$0xff]
    %v268 = vld [vmem:[#allocation2 + $0x638] sm:$0xff]
    %v269 = vld [vmem:[#allocation2 + $0x640] sm:$0xff]
    %v270 = vld [vmem:[#allocation2 + $0x648] sm:$0xff]
    %v271 = vld [vmem:[#allocation2 + $0x650] sm:$0xff]
    %v272 = vld [vmem:[#allocation2 + $0x658] sm:$0xff]
    %v273 = vld [vmem:[#allocation2 + $0x660] sm:$0xff]
    %v274 = vld [vmem:[#allocation2 + $0x668] sm:$0xff]
    %v275 = vld [vmem:[#allocation2 + $0x670] sm:$0xff]
    %v276 = vld [vmem:[#allocation2 + $0x678] sm:$0xff]
    %v277 = vld [vmem:[#allocation2 + $0x680] sm:$0xff]
    %v278 = vld [vmem:[#allocation2 + $0x688] sm:$0xff]
    %v279 = vld [vmem:[#allocation2 + $0x690] sm:$0xff]
    %v280 = vld [vmem:[#allocation2 + $0x698] sm:$0xff]
    %v281 = vld [vmem:[#allocation2 + $0x6a0] sm:$0xff]
    %v282 = vld [vmem:[#allocation2 + $0x6a8] sm:$0xff]
    %v283 = vld [vmem:[#allocation2 + $0x6b0] sm:$0xff]
    %v284 = vld [vmem:[#allocation2 + $0x6b8] sm:$0xff]
    %v285 = vld [vmem:[#allocation2 + $0x6c0] sm:$0xff]
    %v286 = vld [vmem:[#allocation2 + $0x6c8] sm:$0xff]
    %v287 = vld [vmem:[#allocation2 + $0x6d0] sm:$0xff]
    %v288 = vld [vmem:[#allocation2 + $0x6d8] sm:$0xff]
    %v289 = vld [vmem:[#allocation2 + $0x6e0] sm:$0xff]
    %v290 = vld [vmem:[#allocation2 + $0x6e8] sm:$0xff]
    %v291 = vld [vmem:[#allocation2 + $0x6f0] sm:$0xff]
    %v292 = vld [vmem:[#allocation2 + $0x6f8] sm:$0xff]
    %v293 = vld [vmem:[#allocation2 + $0x700] sm:$0xff]
    %v294 = vld [vmem:[#allocation2 + $0x708] sm:$0xff]
    %v295 = vld [vmem:[#allocation2 + $0x710] sm:$0xff]
    %v296 = vld [vmem:[#allocation2 + $0x718] sm:$0xff]
    %v297 = vld [vmem:[#allocation2 + $0x720] sm:$0xff]
    %v298 = vld [vmem:[#allocation2 + $0x728] sm:$0xff]
    %v299 = vld [vmem:[#allocation2 + $0x730] sm:$0xff]
    %v300 = vld [vmem:[#allocation2 + $0x738] sm:$0xff]
    %v301 = vld [vmem:[#allocation2 + $0x740] sm:$0xff]
    %v302 = vld [vmem:[#allocation2 + $0x748] sm:$0xff]
    %v303 = vld [vmem:[#allocation2 + $0x750] sm:$0xff]
    %v304 = vld [vmem:[#allocation2 + $0x758] sm:$0xff]
    %v305 = vld [vmem:[#allocation2 + $0x760] sm:$0xff]
    %v306 = vld [vmem:[#allocation2 + $0x768] sm:$0xff]
    %v307 = vld [vmem:[#allocation2 + $0x770] sm:$0xff]
    %v308 = vld [vmem:[#allocation2 + $0x778] sm:$0xff]
    %v309 = vld [vmem:[#allocation2 + $0x780] sm:$0xff]
    %v310 = vld [vmem:[#allocation2 + $0x788] sm:$0xff]
    %v311 = vld [vmem:[#allocation2 + $0x790] sm:$0xff]
    %v312 = vld [vmem:[#allocation2 + $0x798] sm:$0xff]
    %v313 = vld [vmem:[#allocation2 + $0x7a0] sm:$0xff]
    %v314 = vld [vmem:[#allocation2 + $0x7a8] sm:$0xff]
    %v315 = vld [vmem:[#allocation2 + $0x7b0] sm:$0xff]
    %v316 = vld [vmem:[#allocation2 + $0x7b8] sm:$0xff]
    %v317 = vld [vmem:[#allocation2 + $0x7c0] sm:$0xff]
    %v318 = vld [vmem:[#allocation2 + $0x7c8] sm:$0xff]
    %v319 = vld [vmem:[#allocation2 + $0x7d0] sm:$0xff]
    %v320 = vld [vmem:[#allocation2 + $0x7d8] sm:$0xff]
    %v321 = vld [vmem:[#allocation2 + $0x7e0] sm:$0xff]
    %v322 = vld [vmem:[#allocation2 + $0x7e8] sm:$0xff]
    %v323 = vld [vmem:[#allocation2 + $0x7f0] sm:$0xff]
    %v324 = vld [vmem:[#allocation2 + $0x7f8] sm:$0xff]
    %v325 = vld [vmem:[#allocation2 + $0x800] sm:$0xff]
    %v326 = vld [vmem:[#allocation2 + $0x808] sm:$0xff]
    %v327 = vld [vmem:[#allocation2 + $0x810] sm:$0xff]
    %v328 = vld [vmem:[#allocation2 + $0x818] sm:$0xff]
    %v329 = vld [vmem:[#allocation2 + $0x820] sm:$0xff]
    %v330 = vld [vmem:[#allocation2 + $0x828] sm:$0xff]
    %v331 = vld [vmem:[#allocation2 + $0x830] sm:$0xff]
    %v332 = vld [vmem:[#allocation2 + $0x838] sm:$0xff]
    %v333 = vld [vmem:[#allocation2 + $0x840] sm:$0xff]
    %v334 = vld [vmem:[#allocation2 + $0x848] sm:$0xff]
    %v335 = vld [vmem:[#allocation2 + $0x850] sm:$0xff]
    %v336 = vld [vmem:[#allocation2 + $0x858] sm:$0xff]
    %v337 = vld [vmem:[#allocation2 + $0x860] sm:$0xff]
    %v338 = vld [vmem:[#allocation2 + $0x868] sm:$0xff]
    %v339 = vld [vmem:[#allocation2 + $0x870] sm:$0xff]
    %v340 = vld [vmem:[#allocation2 + $0x878] sm:$0xff]
    %v341 = vld [vmem:[#allocation2 + $0x880] sm:$0xff]
    %v342 = vld [vmem:[#allocation2 + $0x888] sm:$0xff]
    %v343 = vld [vmem:[#allocation2 + $0x890] sm:$0xff]
    %v344 = vld [vmem:[#allocation2 + $0x898] sm:$0xff]
    %v345 = vld [vmem:[#allocation2 + $0x8a0] sm:$0xff]
    %v346 = vld [vmem:[#allocation2 + $0x8a8] sm:$0xff]
    %v347 = vld [vmem:[#allocation2 + $0x8b0] sm:$0xff]
    %v348 = vld [vmem:[#allocation2 + $0x8b8] sm:$0xff]
    %v349 = vld [vmem:[#allocation2 + $0x8c0] sm:$0xff]
    %v350 = vld [vmem:[#allocation2 + $0x8c8] sm:$0xff]
    %v351 = vld [vmem:[#allocation2 + $0x8d0] sm:$0xff]
    %v352 = vld [vmem:[#allocation2 + $0x8d8] sm:$0xff]
    %v353 = vld [vmem:[#allocation2 + $0x8e0] sm:$0xff]
    %v354 = vld [vmem:[#allocation2 + $0x8e8] sm:$0xff]
    %v355 = vld [vmem:[#allocation2 + $0x8f0] sm:$0xff]
    %v356 = vld [vmem:[#allocation2 + $0x8f8] sm:$0xff]
    %v357 = vld [vmem:[#allocation2 + $0x900] sm:$0xff]
    %v358 = vld [vmem:[#allocation2 + $0x908] sm:$0xff]
    %v359 = vld [vmem:[#allocation2 + $0x910] sm:$0xff]
    %v360 = vld [vmem:[#allocation2 + $0x918] sm:$0xff]
    %v361 = vld [vmem:[#allocation2 + $0x920] sm:$0xff]
    %v362 = vld [vmem:[#allocation2 + $0x928] sm:$0xff]
    %v363 = vld [vmem:[#allocation2 + $0x930] sm:$0xff]
    %v364 = vld [vmem:[#allocation2 + $0x938] sm:$0xff]
    %v365 = vld [vmem:[#allocation2 + $0x940] sm:$0xff]
    %v366 = vld [vmem:[#allocation2 + $0x948] sm:$0xff]
    %v367 = vld [vmem:[#allocation2 + $0x950] sm:$0xff]
    %v368 = vld [vmem:[#allocation2 + $0x958] sm:$0xff]
    %v369 = vld [vmem:[#allocation2 + $0x960] sm:$0xff]
    %v370 = vld [vmem:[#allocation2 + $0x968] sm:$0xff]
    %v371 = vld [vmem:[#allocation2 + $0x970] sm:$0xff]
    %v372 = vld [vmem:[#allocation2 + $0x978] sm:$0xff]
    %v373 = vld [vmem:[#allocation2 + $0x980] sm:$0xff]
    %v374 = vld [vmem:[#allocation2 + $0x988] sm:$0xff]
    %v375 = vld [vmem:[#allocation2 + $0x990] sm:$0xff]
    %v376 = vld [vmem:[#allocation2 + $0x998] sm:$0xff]
    %v377 = vld [vmem:[#allocation2 + $0x9a0] sm:$0xff]
    %v378 = vld [vmem:[#allocation2 + $0x9a8] sm:$0xff]
    %v379 = vld [vmem:[#allocation2 + $0x9b0] sm:$0xff]
    %v380 = vld [vmem:[#allocation2 + $0x9b8] sm:$0xff]
    %v381 = vld [vmem:[#allocation2 + $0x9c0] sm:$0xff]
    %v382 = vld [vmem:[#allocation2 + $0x9c8] sm:$0xff]
    %v383 = vld [vmem:[#allocation2 + $0x9d0] sm:$0xff]
    %v384 = vld [vmem:[#allocation2 + $0x9d8] sm:$0xff]
    %v385 = vld [vmem:[#allocation2 + $0x9e0] sm:$0xff]
    %v386 = vld [vmem:[#allocation2 + $0x9e8] sm:$0xff]
    %v387 = vld [vmem:[#allocation2 + $0x9f0] sm:$0xff]
    %v388 = vld [vmem:[#allocation2 + $0x9f8] sm:$0xff]
    %v389 = vld [vmem:[#allocation2 + $0xa00] sm:$0xff]
    %v390 = vld [vmem:[#allocation2 + $0xa08] sm:$0xff]
    %v391 = vld [vmem:[#allocation2 + $0xa10] sm:$0xff]
    %v392 = vld [vmem:[#allocation2 + $0xa18] sm:$0xff]
    %v393 = vld [vmem:[#allocation2 + $0xa20] sm:$0xff]
    %v394 = vld [vmem:[#allocation2 + $0xa28] sm:$0xff]
    %v395 = vld [vmem:[#allocation2 + $0xa30] sm:$0xff]
    %v396 = vld [vmem:[#allocation2 + $0xa38] sm:$0xff]
    %v397 = vld [vmem:[#allocation2 + $0xa40] sm:$0xff]
    %v398 = vld [vmem:[#allocation2 + $0xa48] sm:$0xff]
    %v399 = vld [vmem:[#allocation2 + $0xa50] sm:$0xff]
    %v400 = vld [vmem:[#allocation2 + $0xa58] sm:$0xff]
    %v401 = vld [vmem:[#allocation2 + $0xa60] sm:$0xff]
    %v402 = vld [vmem:[#allocation2 + $0xa68] sm:$0xff]
    %v403 = vld [vmem:[#allocation2 + $0xa70] sm:$0xff]
    %v404 = vld [vmem:[#allocation2 + $0xa78] sm:$0xff]
    %v405 = vld [vmem:[#allocation2 + $0xa80] sm:$0xff]
    %v406 = vld [vmem:[#allocation2 + $0xa88] sm:$0xff]
    %v407 = vld [vmem:[#allocation2 + $0xa90] sm:$0xff]
    %v408 = vld [vmem:[#allocation2 + $0xa98] sm:$0xff]
    %v409 = vld [vmem:[#allocation2 + $0xaa0] sm:$0xff]
    %v410 = vld [vmem:[#allocation2 + $0xaa8] sm:$0xff]
    %v411 = vld [vmem:[#allocation2 + $0xab0] sm:$0xff]
    %v412 = vld [vmem:[#allocation2 + $0xab8] sm:$0xff]
    %v413 = vld [vmem:[#allocation2 + $0xac0] sm:$0xff]
    %v414 = vld [vmem:[#allocation2 + $0xac8] sm:$0xff]
    %v415 = vld [vmem:[#allocation2 + $0xad0] sm:$0xff]
    %v416 = vld [vmem:[#allocation2 + $0xad8] sm:$0xff]
    %v417 = vld [vmem:[#allocation2 + $0xae0] sm:$0xff]
    %v418 = vld [vmem:[#allocation2 + $0xae8] sm:$0xff]
    %v419 = vld [vmem:[#allocation2 + $0xaf0] sm:$0xff]
    %v420 = vld [vmem:[#allocation2 + $0xaf8] sm:$0xff]
    %v421 = vld [vmem:[#allocation2 + $0xb00] sm:$0xff]
    %v422 = vld [vmem:[#allocation2 + $0xb08] sm:$0xff]
    %v423 = vld [vmem:[#allocation2 + $0xb10] sm:$0xff]
    %v424 = vld [vmem:[#allocation2 + $0xb18] sm:$0xff]
    %v425 = vld [vmem:[#allocation2 + $0xb20] sm:$0xff]
    %v426 = vld [vmem:[#allocation2 + $0xb28] sm:$0xff]
    %v427 = vld [vmem:[#allocation2 + $0xb30] sm:$0xff]
    %v428 = vld [vmem:[#allocation2 + $0xb38] sm:$0xff]
    %v429 = vld [vmem:[#allocation2 + $0xb40] sm:$0xff]
    %v430 = vld [vmem:[#allocation2 + $0xb48] sm:$0xff]
    %v431 = vld [vmem:[#allocation2 + $0xb50] sm:$0xff]
    %v432 = vld [vmem:[#allocation2 + $0xb58] sm:$0xff]
    %v433 = vld [vmem:[#allocation2 + $0xb60] sm:$0xff]
    %v434 = vld [vmem:[#allocation2 + $0xb68] sm:$0xff]
    %v435 = vld [vmem:[#allocation2 + $0xb70] sm:$0xff]
    %v436 = vld [vmem:[#allocation2 + $0xb78] sm:$0xff]
    %v437 = vld [vmem:[#allocation2 + $0xb80] sm:$0xff]
    %v438 = vld [vmem:[#allocation2 + $0xb88] sm:$0xff]
    %v439 = vld [vmem:[#allocation2 + $0xb90] sm:$0xff]
    %v440 = vld [vmem:[#allocation2 + $0xb98] sm:$0xff]
    %v441 = vld [vmem:[#allocation2 + $0xba0] sm:$0xff]
    %v442 = vld [vmem:[#allocation2 + $0xba8] sm:$0xff]
    %v443 = vld [vmem:[#allocation2 + $0xbb0] sm:$0xff]
    %v444 = vld [vmem:[#allocation2 + $0xbb8] sm:$0xff]
    %v445 = vld [vmem:[#allocation2 + $0xbc0] sm:$0xff]
    %v446 = vld [vmem:[#allocation2 + $0xbc8] sm:$0xff]
    %v447 = vld [vmem:[#allocation2 + $0xbd0] sm:$0xff]
    %v448 = vld [vmem:[#allocation2 + $0xbd8] sm:$0xff]
    %v449 = vld [vmem:[#allocation2 + $0xbe0] sm:$0xff]
    %v450 = vld [vmem:[#allocation2 + $0xbe8] sm:$0xff]
    %v451 = vld [vmem:[#allocation2 + $0xbf0] sm:$0xff]
    %v452 = vld [vmem:[#allocation2 + $0xbf8] sm:$0xff]
    %v453 = vld [vmem:[#allocation5] sm:$0x1]
    %v455 = vperm.slane %v453, 0
    %481 = vst [vmem:[#allocation1] ss:$4 sm:$0xff] %v45
    %s482 = scalar_lea.vmem [#allocation1], 1
    %483 = vst [vmem:[%s482] ss:$4 sm:$0xff] %v51
    %s484 = scalar_lea.vmem [#allocation1], 2
    %485 = vst [vmem:[%s484] ss:$4 sm:$0xff] %v57
    %s486 = scalar_lea.vmem [#allocation1], 3
    %487 = vst [vmem:[%s486] ss:$4 sm:$0xff] %v63
    %s488 = scalar_lea.vmem [#allocation1], 32
    %489 = vst [vmem:[%s488] ss:$4 sm:$0xff] %v46
    %s490 = scalar_lea.vmem [#allocation1], 33
    %491 = vst [vmem:[%s490] ss:$4 sm:$0xff] %v52
    %s492 = scalar_lea.vmem [#allocation1], 34
    %493 = vst [vmem:[%s492] ss:$4 sm:$0xff] %v58
    %s494 = scalar_lea.vmem [#allocation1], 35
    %495 = vst [vmem:[%s494] ss:$4 sm:$0xff] %v64
    %v496 = vld.sshfl [vmem:[#allocation1] sm:$0xff pattern:$0x73625140]
    %v497 = vld.sshfl [vmem:[#allocation1 + $0x8] sm:$0xff pattern:$0x73625140]
    %v498 = vld.sshfl [vmem:[#allocation1 + $0x10] sm:$0xff pattern:$0x73625140]
    %v499 = vld.sshfl [vmem:[#allocation1 + $0x18] sm:$0xff pattern:$0x73625140]
    %v500 = vld.sshfl [vmem:[#allocation1 + $0x20] sm:$0xff pattern:$0x73625140]
    %v501 = vld.sshfl [vmem:[#allocation1 + $0x28] sm:$0xff pattern:$0x73625140]
    %v502 = vld.sshfl [vmem:[#allocation1 + $0x30] sm:$0xff pattern:$0x73625140]
    %v503 = vld.sshfl [vmem:[#allocation1 + $0x38] sm:$0xff pattern:$0x73625140]
    %504 = vst [vmem:[#allocation1] ss:$4 sm:$0xff] %v47
    %505 = vst [vmem:[%s482] ss:$4 sm:$0xff] %v53
    %506 = vst [vmem:[%s484] ss:$4 sm:$0xff] %v59
    %507 = vst [vmem:[%s486] ss:$4 sm:$0xff] %v65
    %508 = vst [vmem:[%s488] ss:$4 sm:$0xff] %v48
    %509 = vst [vmem:[%s490] ss:$4 sm:$0xff] %v54
    %510 = vst [vmem:[%s492] ss:$4 sm:$0xff] %v60
    %511 = vst [vmem:[%s494] ss:$4 sm:$0xff] %v66
    %v512 = vld.sshfl [vmem:[#allocation1] sm:$0xff pattern:$0x73625140]
    %v513 = vld.sshfl [vmem:[#allocation1 + $0x8] sm:$0xff pattern:$0x73625140]
    %v514 = vld.sshfl [vmem:[#allocation1 + $0x10] sm:$0xff pattern:$0x73625140]
    %v515 = vld.sshfl [vmem:[#allocation1 + $0x18] sm:$0xff pattern:$0x73625140]
    %v516 = vld.sshfl [vmem:[#allocation1 + $0x20] sm:$0xff pattern:$0x73625140]
    %v517 = vld.sshfl [vmem:[#allocation1 + $0x28] sm:$0xff pattern:$0x73625140]
    %v518 = vld.sshfl [vmem:[#allocation1 + $0x30] sm:$0xff pattern:$0x73625140]
    %v519 = vld.sshfl [vmem:[#allocation1 + $0x38] sm:$0xff pattern:$0x73625140]
    %520 = vst [vmem:[#allocation1] ss:$4 sm:$0xff] %v49
    %521 = vst [vmem:[%s482] ss:$4 sm:$0xff] %v55
    %522 = vst [vmem:[%s484] ss:$4 sm:$0xff] %v61
    %523 = vst [vmem:[%s486] ss:$4 sm:$0xff] %v67
    %524 = vst [vmem:[%s488] ss:$4 sm:$0xff] %v50
    %525 = vst [vmem:[%s490] ss:$4 sm:$0xff] %v56
    %526 = vst [vmem:[%s492] ss:$4 sm:$0xff] %v62
    %527 = vst [vmem:[%s494] ss:$4 sm:$0xff] %v68
    %v528 = vld.sshfl [vmem:[#allocation1] sm:$0xff pattern:$0x73625140]
    %v529 = vld.sshfl [vmem:[#allocation1 + $0x8] sm:$0xff pattern:$0x73625140]
    %v530 = vld.sshfl [vmem:[#allocation1 + $0x10] sm:$0xff pattern:$0x73625140]
    %v531 = vld.sshfl [vmem:[#allocation1 + $0x18] sm:$0xff pattern:$0x73625140]
    %v532 = vld.sshfl [vmem:[#allocation1 + $0x20] sm:$0xff pattern:$0x73625140]
    %v533 = vld.sshfl [vmem:[#allocation1 + $0x28] sm:$0xff pattern:$0x73625140]
    %v534 = vld.sshfl [vmem:[#allocation1 + $0x30] sm:$0xff pattern:$0x73625140]
    %v535 = vld.sshfl [vmem:[#allocation1 + $0x38] sm:$0xff pattern:$0x73625140]
    %560 = vmatpush.msra.mxu0 %v84
    %561 = vmatpush.msra.mxu0 %v83
    %562 = vmatpush.msra.mxu0 %v82
    %563 = vmatpush.msra.mxu0 %v81
    %564 = vmatpush.msra.mxu0 %v80
    %565 = vmatpush.msra.mxu0 %v79
    %566 = vmatpush.msra.mxu0 %v78
    %567 = vmatpush.msra.mxu0 %v77
    %568 = vmatpush.msra.mxu0 %v76
    %569 = vmatpush.msra.mxu0 %v75
    %570 = vmatpush.msra.mxu0 %v74
    %571 = vmatpush.msra.mxu0 %v73
    %572 = vmatpush.msra.mxu0 %v72
    %573 = vmatpush.msra.mxu0 %v71
    %574 = vmatpush.msra.mxu0 %v70
    %575 = vmatpush.msra.mxu0 %v69
    %576 = vmatmul.f32.gmra.mxu0 %v496
    %v577 = vpop.f32.mrf.mxu0
    %v578 = vadd.f32 %v455, %v577
    %579 = vdwg.mxu0
    %580 = vmatpush.msra.mxu0 %v100
    %581 = vmatpush.msra.mxu0 %v99
    %582 = vmatpush.msra.mxu0 %v98
    %583 = vmatpush.msra.mxu0 %v97
    %584 = vmatpush.msra.mxu0 %v96
    %585 = vmatpush.msra.mxu0 %v95
    %586 = vmatpush.msra.mxu0 %v94
    %587 = vmatpush.msra.mxu0 %v93
    %588 = vmatpush.msra.mxu0 %v92
    %589 = vmatpush.msra.mxu0 %v91
    %590 = vmatpush.msra.mxu0 %v90
    %591 = vmatpush.msra.mxu0 %v89
    %592 = vmatpush.msra.mxu0 %v88
    %593 = vmatpush.msra.mxu0 %v87
    %594 = vmatpush.msra.mxu0 %v86
    %595 = vmatpush.msra.mxu0 %v85
    %596 = vmatmul.f32.gmra.mxu0 %v497
    %v597 = vpop.f32.mrf.mxu0
    %v598 = vadd.f32 %v578, %v597
    %599 = vdwg.mxu0
    %600 = vmatpush.msra.mxu0 %v116
    %601 = vmatpush.msra.mxu0 %v115
    %602 = vmatpush.msra.mxu0 %v114
    %603 = vmatpush.msra.mxu0 %v113
    %604 = vmatpush.msra.mxu0 %v112
    %605 = vmatpush.msra.mxu0 %v111
    %606 = vmatpush.msra.mxu0 %v110
    %607 = vmatpush.msra.mxu0 %v109
    %608 = vmatpush.msra.mxu0 %v108
    %609 = vmatpush.msra.mxu0 %v107
    %610 = vmatpush.msra.mxu0 %v106
    %611 = vmatpush.msra.mxu0 %v105
    %612 = vmatpush.msra.mxu0 %v104
    %613 = vmatpush.msra.mxu0 %v103
    %614 = vmatpush.msra.mxu0 %v102
    %615 = vmatpush.msra.mxu0 %v101
    %616 = vmatmul.f32.gmra.mxu0 %v498
    %v617 = vpop.f32.mrf.mxu0
    %v618 = vadd.f32 %v598, %v617
    %619 = vdwg.mxu0
    %620 = vmatpush.msra.mxu0 %v132
    %621 = vmatpush.msra.mxu0 %v131
    %622 = vmatpush.msra.mxu0 %v130
    %623 = vmatpush.msra.mxu0 %v129
    %624 = vmatpush.msra.mxu0 %v128
    %625 = vmatpush.msra.mxu0 %v127
    %626 = vmatpush.msra.mxu0 %v126
    %627 = vmatpush.msra.mxu0 %v125
    %628 = vmatpush.msra.mxu0 %v124
    %629 = vmatpush.msra.mxu0 %v123
    %630 = vmatpush.msra.mxu0 %v122
    %631 = vmatpush.msra.mxu0 %v121
    %632 = vmatpush.msra.mxu0 %v120
    %633 = vmatpush.msra.mxu0 %v119
    %634 = vmatpush.msra.mxu0 %v118
    %635 = vmatpush.msra.mxu0 %v117
    %636 = vmatmul.f32.gmra.mxu0 %v499
    %v637 = vpop.f32.mrf.mxu0
    %v638 = vadd.f32 %v618, %v637
    %639 = vdwg.mxu0
    %640 = vmatpush.msra.mxu0 %v148
    %641 = vmatpush.msra.mxu0 %v147
    %642 = vmatpush.msra.mxu0 %v146
    %643 = vmatpush.msra.mxu0 %v145
    %644 = vmatpush.msra.mxu0 %v144
    %645 = vmatpush.msra.mxu0 %v143
    %646 = vmatpush.msra.mxu0 %v142
    %647 = vmatpush.msra.mxu0 %v141
    %648 = vmatpush.msra.mxu0 %v140
    %649 = vmatpush.msra.mxu0 %v139
    %650 = vmatpush.msra.mxu0 %v138
    %651 = vmatpush.msra.mxu0 %v137
    %652 = vmatpush.msra.mxu0 %v136
    %653 = vmatpush.msra.mxu0 %v135
    %654 = vmatpush.msra.mxu0 %v134
    %655 = vmatpush.msra.mxu0 %v133
    %656 = vmatmul.f32.gmra.mxu0 %v500
    %v657 = vpop.f32.mrf.mxu0
    %v658 = vadd.f32 %v638, %v657
    %659 = vdwg.mxu0
    %660 = vmatpush.msra.mxu0 %v164
    %661 = vmatpush.msra.mxu0 %v163
    %662 = vmatpush.msra.mxu0 %v162
    %663 = vmatpush.msra.mxu0 %v161
    %664 = vmatpush.msra.mxu0 %v160
    %665 = vmatpush.msra.mxu0 %v159
    %666 = vmatpush.msra.mxu0 %v158
    %667 = vmatpush.msra.mxu0 %v157
    %668 = vmatpush.msra.mxu0 %v156
    %669 = vmatpush.msra.mxu0 %v155
    %670 = vmatpush.msra.mxu0 %v154
    %671 = vmatpush.msra.mxu0 %v153
    %672 = vmatpush.msra.mxu0 %v152
    %673 = vmatpush.msra.mxu0 %v151
    %674 = vmatpush.msra.mxu0 %v150
    %675 = vmatpush.msra.mxu0 %v149
    %676 = vmatmul.f32.gmra.mxu0 %v501
    %v677 = vpop.f32.mrf.mxu0
    %v678 = vadd.f32 %v658, %v677
    %679 = vdwg.mxu0
    %680 = vmatpush.msra.mxu0 %v180
    %681 = vmatpush.msra.mxu0 %v179
    %682 = vmatpush.msra.mxu0 %v178
    %683 = vmatpush.msra.mxu0 %v177
    %684 = vmatpush.msra.mxu0 %v176
    %685 = vmatpush.msra.mxu0 %v175
    %686 = vmatpush.msra.mxu0 %v174
    %687 = vmatpush.msra.mxu0 %v173
    %688 = vmatpush.msra.mxu0 %v172
    %689 = vmatpush.msra.mxu0 %v171
    %690 = vmatpush.msra.mxu0 %v170
    %691 = vmatpush.msra.mxu0 %v169
    %692 = vmatpush.msra.mxu0 %v168
    %693 = vmatpush.msra.mxu0 %v167
    %694 = vmatpush.msra.mxu0 %v166
    %695 = vmatpush.msra.mxu0 %v165
    %696 = vmatmul.f32.gmra.mxu0 %v502
    %v697 = vpop.f32.mrf.mxu0
    %v698 = vadd.f32 %v678, %v697
    %699 = vdwg.mxu0
    %700 = vmatpush.msra.mxu0 %v196
    %701 = vmatpush.msra.mxu0 %v195
    %702 = vmatpush.msra.mxu0 %v194
    %703 = vmatpush.msra.mxu0 %v193
    %704 = vmatpush.msra.mxu0 %v192
    %705 = vmatpush.msra.mxu0 %v191
    %706 = vmatpush.msra.mxu0 %v190
    %707 = vmatpush.msra.mxu0 %v189
    %708 = vmatpush.msra.mxu0 %v188
    %709 = vmatpush.msra.mxu0 %v187
    %710 = vmatpush.msra.mxu0 %v186
    %711 = vmatpush.msra.mxu0 %v185
    %712 = vmatpush.msra.mxu0 %v184
    %713 = vmatpush.msra.mxu0 %v183
    %714 = vmatpush.msra.mxu0 %v182
    %715 = vmatpush.msra.mxu0 %v181
    %716 = vmatmul.f32.gmra.mxu0 %v503
    %v717 = vpop.f32.mrf.mxu0
    %v718 = vadd.f32 %v698, %v717
    %719 = vdwg.mxu0
    %720 = vmatpush.msra.mxu0 %v212
    %721 = vmatpush.msra.mxu0 %v211
    %722 = vmatpush.msra.mxu0 %v210
    %723 = vmatpush.msra.mxu0 %v209
    %724 = vmatpush.msra.mxu0 %v208
    %725 = vmatpush.msra.mxu0 %v207
    %726 = vmatpush.msra.mxu0 %v206
    %727 = vmatpush.msra.mxu0 %v205
    %728 = vmatpush.msra.mxu0 %v204
    %729 = vmatpush.msra.mxu0 %v203
    %730 = vmatpush.msra.mxu0 %v202
    %731 = vmatpush.msra.mxu0 %v201
    %732 = vmatpush.msra.mxu0 %v200
    %733 = vmatpush.msra.mxu0 %v199
    %734 = vmatpush.msra.mxu0 %v198
    %735 = vmatpush.msra.mxu0 %v197
    %736 = vmatmul.f32.gmra.mxu0 %v512
    %v737 = vpop.f32.mrf.mxu0
    %v738 = vadd.f32 %v718, %v737
    %739 = vdwg.mxu0
    %740 = vmatpush.msra.mxu0 %v228
    %741 = vmatpush.msra.mxu0 %v227
    %742 = vmatpush.msra.mxu0 %v226
    %743 = vmatpush.msra.mxu0 %v225
    %744 = vmatpush.msra.mxu0 %v224
    %745 = vmatpush.msra.mxu0 %v223
    %746 = vmatpush.msra.mxu0 %v222
    %747 = vmatpush.msra.mxu0 %v221
    %748 = vmatpush.msra.mxu0 %v220
    %749 = vmatpush.msra.mxu0 %v219
    %750 = vmatpush.msra.mxu0 %v218
    %751 = vmatpush.msra.mxu0 %v217
    %752 = vmatpush.msra.mxu0 %v216
    %753 = vmatpush.msra.mxu0 %v215
    %754 = vmatpush.msra.mxu0 %v214
    %755 = vmatpush.msra.mxu0 %v213
    %756 = vmatmul.f32.gmra.mxu0 %v513
    %v757 = vpop.f32.mrf.mxu0
    %v758 = vadd.f32 %v738, %v757
    %759 = vdwg.mxu0
    %760 = vmatpush.msra.mxu0 %v244
    %761 = vmatpush.msra.mxu0 %v243
    %762 = vmatpush.msra.mxu0 %v242
    %763 = vmatpush.msra.mxu0 %v241
    %764 = vmatpush.msra.mxu0 %v240
    %765 = vmatpush.msra.mxu0 %v239
    %766 = vmatpush.msra.mxu0 %v238
    %767 = vmatpush.msra.mxu0 %v237
    %768 = vmatpush.msra.mxu0 %v236
    %769 = vmatpush.msra.mxu0 %v235
    %770 = vmatpush.msra.mxu0 %v234
    %771 = vmatpush.msra.mxu0 %v233
    %772 = vmatpush.msra.mxu0 %v232
    %773 = vmatpush.msra.mxu0 %v231
    %774 = vmatpush.msra.mxu0 %v230
    %775 = vmatpush.msra.mxu0 %v229
    %776 = vmatmul.f32.gmra.mxu0 %v514
    %v777 = vpop.f32.mrf.mxu0
    %v778 = vadd.f32 %v758, %v777
    %779 = vdwg.mxu0
    %780 = vmatpush.msra.mxu0 %v260
    %781 = vmatpush.msra.mxu0 %v259
    %782 = vmatpush.msra.mxu0 %v258
    %783 = vmatpush.msra.mxu0 %v257
    %784 = vmatpush.msra.mxu0 %v256
    %785 = vmatpush.msra.mxu0 %v255
    %786 = vmatpush.msra.mxu0 %v254
    %787 = vmatpush.msra.mxu0 %v253
    %788 = vmatpush.msra.mxu0 %v252
    %789 = vmatpush.msra.mxu0 %v251
    %790 = vmatpush.msra.mxu0 %v250
    %791 = vmatpush.msra.mxu0 %v249
    %792 = vmatpush.msra.mxu0 %v248
    %793 = vmatpush.msra.mxu0 %v247
    %794 = vmatpush.msra.mxu0 %v246
    %795 = vmatpush.msra.mxu0 %v245
    %796 = vmatmul.f32.gmra.mxu0 %v515
    %v797 = vpop.f32.mrf.mxu0
    %v798 = vadd.f32 %v778, %v797
    %799 = vdwg.mxu0
    %800 = vmatpush.msra.mxu0 %v276
    %801 = vmatpush.msra.mxu0 %v275
    %802 = vmatpush.msra.mxu0 %v274
    %803 = vmatpush.msra.mxu0 %v273
    %804 = vmatpush.msra.mxu0 %v272
    %805 = vmatpush.msra.mxu0 %v271
    %806 = vmatpush.msra.mxu0 %v270
    %807 = vmatpush.msra.mxu0 %v269
    %808 = vmatpush.msra.mxu0 %v268
    %809 = vmatpush.msra.mxu0 %v267
    %810 = vmatpush.msra.mxu0 %v266
    %811 = vmatpush.msra.mxu0 %v265
    %812 = vmatpush.msra.mxu0 %v264
    %813 = vmatpush.msra.mxu0 %v263
    %814 = vmatpush.msra.mxu0 %v262
    %815 = vmatpush.msra.mxu0 %v261
    %816 = vmatmul.f32.gmra.mxu0 %v516
    %v817 = vpop.f32.mrf.mxu0
    %v818 = vadd.f32 %v798, %v817
    %819 = vdwg.mxu0
    %820 = vmatpush.msra.mxu0 %v292
    %821 = vmatpush.msra.mxu0 %v291
    %822 = vmatpush.msra.mxu0 %v290
    %823 = vmatpush.msra.mxu0 %v289
    %824 = vmatpush.msra.mxu0 %v288
    %825 = vmatpush.msra.mxu0 %v287
    %826 = vmatpush.msra.mxu0 %v286
    %827 = vmatpush.msra.mxu0 %v285
    %828 = vmatpush.msra.mxu0 %v284
    %829 = vmatpush.msra.mxu0 %v283
    %830 = vmatpush.msra.mxu0 %v282
    %831 = vmatpush.msra.mxu0 %v281
    %832 = vmatpush.msra.mxu0 %v280
    %833 = vmatpush.msra.mxu0 %v279
    %834 = vmatpush.msra.mxu0 %v278
    %835 = vmatpush.msra.mxu0 %v277
    %836 = vmatmul.f32.gmra.mxu0 %v517
    %v837 = vpop.f32.mrf.mxu0
    %v838 = vadd.f32 %v818, %v837
    %839 = vdwg.mxu0
    %840 = vmatpush.msra.mxu0 %v308
    %841 = vmatpush.msra.mxu0 %v307
    %842 = vmatpush.msra.mxu0 %v306
    %843 = vmatpush.msra.mxu0 %v305
    %844 = vmatpush.msra.mxu0 %v304
    %845 = vmatpush.msra.mxu0 %v303
    %846 = vmatpush.msra.mxu0 %v302
    %847 = vmatpush.msra.mxu0 %v301
    %848 = vmatpush.msra.mxu0 %v300
    %849 = vmatpush.msra.mxu0 %v299
    %850 = vmatpush.msra.mxu0 %v298
    %851 = vmatpush.msra.mxu0 %v297
    %852 = vmatpush.msra.mxu0 %v296
    %853 = vmatpush.msra.mxu0 %v295
    %854 = vmatpush.msra.mxu0 %v294
    %855 = vmatpush.msra.mxu0 %v293
    %856 = vmatmul.f32.gmra.mxu0 %v518
    %v857 = vpop.f32.mrf.mxu0
    %v858 = vadd.f32 %v838, %v857
    %859 = vdwg.mxu0
    %860 = vmatpush.msra.mxu0 %v324
    %861 = vmatpush.msra.mxu0 %v323
    %862 = vmatpush.msra.mxu0 %v322
    %863 = vmatpush.msra.mxu0 %v321
    %864 = vmatpush.msra.mxu0 %v320
    %865 = vmatpush.msra.mxu0 %v319
    %866 = vmatpush.msra.mxu0 %v318
    %867 = vmatpush.msra.mxu0 %v317
    %868 = vmatpush.msra.mxu0 %v316
    %869 = vmatpush.msra.mxu0 %v315
    %870 = vmatpush.msra.mxu0 %v314
    %871 = vmatpush.msra.mxu0 %v313
    %872 = vmatpush.msra.mxu0 %v312
    %873 = vmatpush.msra.mxu0 %v311
    %874 = vmatpush.msra.mxu0 %v310
    %875 = vmatpush.msra.mxu0 %v309
    %876 = vmatmul.f32.gmra.mxu0 %v519
    %v877 = vpop.f32.mrf.mxu0
    %v878 = vadd.f32 %v858, %v877
    %879 = vdwg.mxu0
    %880 = vmatpush.msra.mxu0 %v340
    %881 = vmatpush.msra.mxu0 %v339
    %882 = vmatpush.msra.mxu0 %v338
    %883 = vmatpush.msra.mxu0 %v337
    %884 = vmatpush.msra.mxu0 %v336
    %885 = vmatpush.msra.mxu0 %v335
    %886 = vmatpush.msra.mxu0 %v334
    %887 = vmatpush.msra.mxu0 %v333
    %888 = vmatpush.msra.mxu0 %v332
    %889 = vmatpush.msra.mxu0 %v331
    %890 = vmatpush.msra.mxu0 %v330
    %891 = vmatpush.msra.mxu0 %v329
    %892 = vmatpush.msra.mxu0 %v328
    %893 = vmatpush.msra.mxu0 %v327
    %894 = vmatpush.msra.mxu0 %v326
    %895 = vmatpush.msra.mxu0 %v325
    %896 = vmatmul.f32.gmra.mxu0 %v528
    %v897 = vpop.f32.mrf.mxu0
    %v898 = vadd.f32 %v878, %v897
    %899 = vdwg.mxu0
    %900 = vmatpush.msra.mxu0 %v356
    %901 = vmatpush.msra.mxu0 %v355
    %902 = vmatpush.msra.mxu0 %v354
    %903 = vmatpush.msra.mxu0 %v353
    %904 = vmatpush.msra.mxu0 %v352
    %905 = vmatpush.msra.mxu0 %v351
    %906 = vmatpush.msra.mxu0 %v350
    %907 = vmatpush.msra.mxu0 %v349
    %908 = vmatpush.msra.mxu0 %v348
    %909 = vmatpush.msra.mxu0 %v347
    %910 = vmatpush.msra.mxu0 %v346
    %911 = vmatpush.msra.mxu0 %v345
    %912 = vmatpush.msra.mxu0 %v344
    %913 = vmatpush.msra.mxu0 %v343
    %914 = vmatpush.msra.mxu0 %v342
    %915 = vmatpush.msra.mxu0 %v341
    %916 = vmatmul.f32.gmra.mxu0 %v529
    %v917 = vpop.f32.mrf.mxu0
    %v918 = vadd.f32 %v898, %v917
    %919 = vdwg.mxu0
    %920 = vmatpush.msra.mxu0 %v372
    %921 = vmatpush.msra.mxu0 %v371
    %922 = vmatpush.msra.mxu0 %v370
    %923 = vmatpush.msra.mxu0 %v369
    %924 = vmatpush.msra.mxu0 %v368
    %925 = vmatpush.msra.mxu0 %v367
    %926 = vmatpush.msra.mxu0 %v366
    %927 = vmatpush.msra.mxu0 %v365
    %928 = vmatpush.msra.mxu0 %v364
    %929 = vmatpush.msra.mxu0 %v363
    %930 = vmatpush.msra.mxu0 %v362
    %931 = vmatpush.msra.mxu0 %v361
    %932 = vmatpush.msra.mxu0 %v360
    %933 = vmatpush.msra.mxu0 %v359
    %934 = vmatpush.msra.mxu0 %v358
    %935 = vmatpush.msra.mxu0 %v357
    %936 = vmatmul.f32.gmra.mxu0 %v530
    %v937 = vpop.f32.mrf.mxu0
    %v938 = vadd.f32 %v918, %v937
    %939 = vdwg.mxu0
    %940 = vmatpush.msra.mxu0 %v388
    %941 = vmatpush.msra.mxu0 %v387
    %942 = vmatpush.msra.mxu0 %v386
    %943 = vmatpush.msra.mxu0 %v385
    %944 = vmatpush.msra.mxu0 %v384
    %945 = vmatpush.msra.mxu0 %v383
    %946 = vmatpush.msra.mxu0 %v382
    %947 = vmatpush.msra.mxu0 %v381
    %948 = vmatpush.msra.mxu0 %v380
    %949 = vmatpush.msra.mxu0 %v379
    %950 = vmatpush.msra.mxu0 %v378
    %951 = vmatpush.msra.mxu0 %v377
    %952 = vmatpush.msra.mxu0 %v376
    %953 = vmatpush.msra.mxu0 %v375
    %954 = vmatpush.msra.mxu0 %v374
    %955 = vmatpush.msra.mxu0 %v373
    %956 = vmatmul.f32.gmra.mxu0 %v531
    %v957 = vpop.f32.mrf.mxu0
    %v958 = vadd.f32 %v938, %v957
    %959 = vdwg.mxu0
    %960 = vmatpush.msra.mxu0 %v404
    %961 = vmatpush.msra.mxu0 %v403
    %962 = vmatpush.msra.mxu0 %v402
    %963 = vmatpush.msra.mxu0 %v401
    %964 = vmatpush.msra.mxu0 %v400
    %965 = vmatpush.msra.mxu0 %v399
    %966 = vmatpush.msra.mxu0 %v398
    %967 = vmatpush.msra.mxu0 %v397
    %968 = vmatpush.msra.mxu0 %v396
    %969 = vmatpush.msra.mxu0 %v395
    %970 = vmatpush.msra.mxu0 %v394
    %971 = vmatpush.msra.mxu0 %v393
    %972 = vmatpush.msra.mxu0 %v392
    %973 = vmatpush.msra.mxu0 %v391
    %974 = vmatpush.msra.mxu0 %v390
    %975 = vmatpush.msra.mxu0 %v389
    %976 = vmatmul.f32.gmra.mxu0 %v532
    %v977 = vpop.f32.mrf.mxu0
    %v978 = vadd.f32 %v958, %v977
    %979 = vdwg.mxu0
    %980 = vmatpush.msra.mxu0 %v420
    %981 = vmatpush.msra.mxu0 %v419
    %982 = vmatpush.msra.mxu0 %v418
    %983 = vmatpush.msra.mxu0 %v417
    %984 = vmatpush.msra.mxu0 %v416
    %985 = vmatpush.msra.mxu0 %v415
    %986 = vmatpush.msra.mxu0 %v414
    %987 = vmatpush.msra.mxu0 %v413
    %988 = vmatpush.msra.mxu0 %v412
    %989 = vmatpush.msra.mxu0 %v411
    %990 = vmatpush.msra.mxu0 %v410
    %991 = vmatpush.msra.mxu0 %v409
    %992 = vmatpush.msra.mxu0 %v408
    %993 = vmatpush.msra.mxu0 %v407
    %994 = vmatpush.msra.mxu0 %v406
    %995 = vmatpush.msra.mxu0 %v405
    %996 = vmatmul.f32.gmra.mxu0 %v533
    %v997 = vpop.f32.mrf.mxu0
    %v998 = vadd.f32 %v978, %v997
    %999 = vdwg.mxu0
    %1000 = vmatpush.msra.mxu0 %v436
    %1001 = vmatpush.msra.mxu0 %v435
    %1002 = vmatpush.msra.mxu0 %v434
    %1003 = vmatpush.msra.mxu0 %v433
    %1004 = vmatpush.msra.mxu0 %v432
    %1005 = vmatpush.msra.mxu0 %v431
    %1006 = vmatpush.msra.mxu0 %v430
    %1007 = vmatpush.msra.mxu0 %v429
    %1008 = vmatpush.msra.mxu0 %v428
    %1009 = vmatpush.msra.mxu0 %v427
    %1010 = vmatpush.msra.mxu0 %v426
    %1011 = vmatpush.msra.mxu0 %v425
    %1012 = vmatpush.msra.mxu0 %v424
    %1013 = vmatpush.msra.mxu0 %v423
    %1014 = vmatpush.msra.mxu0 %v422
    %1015 = vmatpush.msra.mxu0 %v421
    %1016 = vmatmul.f32.gmra.mxu0 %v534
    %v1017 = vpop.f32.mrf.mxu0
    %v1018 = vadd.f32 %v998, %v1017
    %1019 = vdwg.mxu0
    %1020 = vmatpush.msra.mxu0 %v452
    %1021 = vmatpush.msra.mxu0 %v451
    %1022 = vmatpush.msra.mxu0 %v450
    %1023 = vmatpush.msra.mxu0 %v449
    %1024 = vmatpush.msra.mxu0 %v448
    %1025 = vmatpush.msra.mxu0 %v447
    %1026 = vmatpush.msra.mxu0 %v446
    %1027 = vmatpush.msra.mxu0 %v445
    %1028 = vmatpush.msra.mxu0 %v444
    %1029 = vmatpush.msra.mxu0 %v443
    %1030 = vmatpush.msra.mxu0 %v442
    %1031 = vmatpush.msra.mxu0 %v441
    %1032 = vmatpush.msra.mxu0 %v440
    %1033 = vmatpush.msra.mxu0 %v439
    %1034 = vmatpush.msra.mxu0 %v438
    %1035 = vmatpush.msra.mxu0 %v437
    %1036 = vmatmul.f32.gmra.mxu0 %v535
    %v1037 = vpop.f32.mrf.mxu0
    %v1038 = vadd.f32 %v1018, %v1037
    %1039 = vdwg.mxu0
    %1040 = vst [vmem:[#allocation7] sm:$0xff] %v1038
    // Predicated region
    $region22: #{test_network_forward.1} parent=1 // pred_check
      _
    $region23: #{test_network_forward.1} parent=1 // pred_check_branch
      %1042 = sbr.rel (0) target = $region25
    $region24: #{test_network_forward.1} parent=1 // pred_region
      %1044 = vsyncadd [#allocation4], 96
      %s1045 = sshll.u32 [#allocation7], 4
      %s1046 = int_to_ptr.vmem [resolvable:$true] %s1045
      %s1047 = sshll.u32 %s3, 4
      %s1048 = int_to_ptr.hbm [resolvable:$true] %s1047
      %1053 = dma.vmem_to_hbm [thread:$0]  %s1046, 32, %s1048, [#allocation4], 32, 32, 2
    $region25: #{test_network_forward.1} parent=1 // pred_fallthru
      _
    // Predicated region
    $region26: #{test_network_forward.1} parent=1 // pred_check
      _
    $region27: #{test_network_forward.1} parent=1 // pred_check_branch
      %1055 = sbr.rel (0) target = $region29
    $region28: #{test_network_forward.1} parent=1 // pred_region
      %1057 = dma.done [#allocation4], 128
    $region29: #{test_network_forward.1} parent=1 // pred_fallthru
      _
    %1058 = vsyncpa [#allocation3], 1
    %1059 = vsyncpa [#allocation6], 1
    %1060 = vsyncpa [#allocation4], 1

</llo_original>
